<compile_context>
chip_gen: v5e
topology: v5e:2x2
jax: 0.10.0
libtpu: 0.0.40
codegen_flags: <defaults>
</compile_context>

<pallas_src>
import functools

import jax
import jax.numpy as jnp
from jax.experimental import pallas as pl
from jax.experimental.pallas import tpu as pltpu

LANES = 128


def _round_up(x: int, m: int) -> int:
    return ((x + m - 1) // m) * m


def _ece_bin_sum_kernel(x_ref, labels_ref, out_ref, acc_ref, *, n_bins: int):
    # x_ref:      [TS, 128] f32  (logits of the calibrated class, -inf padded)
    # labels_ref: [TS, 128] i32  (zero padded; padded lanes excluded via bins)
    # out_ref:    [NBP, 128] f32 per-split partial sums (written at last step)
    # acc_ref:    [NBP, 128] f32 VMEM accumulator (persists across grid steps)
    step = pl.program_id(1)

    @pl.when(step == 0)
    def _():
        acc_ref[...] = jnp.zeros_like(acc_ref)

    x = x_ref[...]                                      # [TS, 128]
    # Numerically stable sigmoid; tanh goes to the EUP (free slot), and
    # sigmoid(-inf) == 0 exactly so -inf-padded lanes land in "bin -1".
    conf = 0.5 * (jnp.tanh(0.5 * x) + 1.0)

    pred = (conf > 0.5).astype(jnp.int32)
    acc = (pred == labels_ref[...]).astype(jnp.float32)
    diff = conf - acc                                   # per-sample conf_i - acc_i

    # conf in (b/n_bins, (b+1)/n_bins]  <=>  ceil(conf * n_bins) - 1 == b
    bin_idx = jnp.ceil(conf * float(n_bins)) - 1.0      # [TS, 128]; padding -> -1

    # Per-bin, lane-partial sums of diff (sublane reduce only). Cross-lane
    # reduce / abs / 1/N are deferred to the tiny wrapper finalize.
    for b in range(n_bins):
        masked = jnp.where(bin_idx == float(b), diff, 0.0)           # [TS, 128]
        acc_ref[pl.ds(b, 1), :] += jnp.sum(masked, axis=0, keepdims=True)

    @pl.when(step == pl.num_programs(1) - 1)
    def _():
        out_ref[...] = acc_ref[...]


def ece_loss(logits, labels, clss, n_bins: int = 15,
             tile_sublanes: int = 256, num_splits=None):
    """logits: [N, C] float, labels: [N] int, clss: int. Returns ece, shape (1,)."""
    N, _ = logits.shape

    # Gather only the calibrated class column (no [C, N] transpose / full DMA).
    col = jnp.take(jnp.asarray(logits, jnp.float32),
                   jnp.asarray(clss, jnp.int32), axis=1)              # [N]
    labels_i = jnp.asarray(labels, jnp.int32).reshape(-1)             # [N]

    rows_min = -(-N // LANES)                                         # ceil(N/128)
    ts = min(_round_up(tile_sublanes, 8), _round_up(rows_min, 8))
    if num_splits is None:
        # Split N across TensorCores (v7x) only when each split gets >= 1 full
        # tile; the extra split is ~free on 1-TC chips (runs sequentially).
        num_splits = 2 if rows_min >= 2 * ts else 1
    rows_pad = _round_up(rows_min, ts * num_splits)
    n_pad = rows_pad * LANES

    # -inf padding: sigmoid(-inf) == 0 -> bin -1 -> excluded; divisor stays N.
    col_p = jnp.pad(col, (0, n_pad - N),
                    constant_values=-jnp.inf).reshape(rows_pad, LANES)
    lab_p = jnp.pad(labels_i, (0, n_pad - N)).reshape(rows_pad, LANES)

    nbp = _round_up(n_bins, 8)                 # pad bin axis to sublane multiple
    tiles_per_split = rows_pad // (ts * num_splits)

    kernel = functools.partial(_ece_bin_sum_kernel, n_bins=n_bins)
    partials = pl.pallas_call(
        kernel,
        out_shape=jax.ShapeDtypeStruct((num_splits * nbp, LANES), jnp.float32),
        grid_spec=pltpu.PrefetchScalarGridSpec(
            num_scalar_prefetch=0,
            grid=(num_splits, tiles_per_split),
            in_specs=[
                pl.BlockSpec((ts, LANES),
                             lambda s, i: (s * tiles_per_split + i, 0)),
                pl.BlockSpec((ts, LANES),
                             lambda s, i: (s * tiles_per_split + i, 0)),
            ],
            out_specs=pl.BlockSpec((nbp, LANES), lambda s, i: (s, 0)),
            scratch_shapes=[pltpu.VMEM((nbp, LANES), jnp.float32)],
        ),
        compiler_params=pltpu.CompilerParams(
            dimension_semantics=("parallel", "arbitrary"),
        ),
    )(col_p, lab_p)

    # Tiny finalize: cross-split + cross-lane reduce, abs, scale by 1/N.
    # Padded bin rows are never touched (stay 0) so including them is harmless.
    per_bin = partials.reshape(num_splits, nbp, LANES).sum(axis=(0, 2))   # [nbp]
    ece = jnp.sum(jnp.abs(per_bin)) * (1.0 / float(N))
    return ece.reshape(1).astype(jnp.float32)


def _ece_reference(logits, labels, clss, n_bins: int = 15):
    """Pure-JAX reference with the original gt/le formulation."""
    conf = jax.nn.sigmoid(jnp.asarray(logits, jnp.float32))[:, clss]
    preds = (conf > 0.5).astype(jnp.int32)
    acc = (preds == jnp.asarray(labels, jnp.int32)).astype(jnp.float32)
    ece = jnp.zeros((1,), jnp.float32)
    bounds = jnp.linspace(0.0, 1.0, n_bins + 1)
    for b in range(n_bins):
        lo, hi = bounds[b], bounds[b + 1]
        in_bin = jnp.logical_and(conf > lo, conf <= hi).astype(jnp.float32)
        cnt = jnp.sum(in_bin)
        prop = cnt / conf.shape[0]
        safe = jnp.maximum(cnt, 1.0)
        gap = jnp.abs(jnp.sum(in_bin * conf) / safe - jnp.sum(in_bin * acc) / safe)
        ece = ece + jnp.where(cnt > 0, gap * prop, 0.0)
    return ece


if __name__ == "__main__":
    key = jax.random.PRNGKey(0)
    k1, k2, k3, k4 = jax.random.split(key, 4)

    n_bins = 15

    # Small case (matches the module's forward: logits [N, C], labels [N]).
    N, C, clss = 16, 4, 1
    logits = jax.random.normal(k1, (N, C), dtype=jnp.float32) * 2.0
    labels = jax.random.bernoulli(k2, 0.5, (N,)).astype(jnp.int32)
    ece = jax.block_until_ready(ece_loss(logits, labels, clss, n_bins=n_bins))
    ref = jax.block_until_ready(_ece_reference(logits, labels, clss, n_bins=n_bins))
    assert ece.shape == (1,)
    assert jnp.allclose(ece, ref, atol=1e-5), (ece, ref)

    # Larger case forcing multiple tiles per split and the 2-way parallel split.
    N2, C2 = 6144, 3
    logits2 = jax.random.normal(k3, (N2, C2), dtype=jnp.float32) * 3.0
    labels2 = jax.random.bernoulli(k4, 0.5, (N2,)).astype(jnp.int32)
    ece2 = jax.block_until_ready(
        ece_loss(logits2, labels2, 0, n_bins=n_bins, tile_sublanes=8))
    ref2 = jax.block_until_ready(_ece_reference(logits2, labels2, 0, n_bins=n_bins))
    assert jnp.allclose(ece2, ref2, atol=1e-5), (ece2, ref2)

    print("KERNEL_OK")
</pallas_src>

<mosaic_0001>
module attributes {stable_mosaic.version = 11 : i64} {
  func.func @_ece_bin_sum_kernel(%arg0: i32, %arg1: i32, %arg2: memref<8x128xf32, #tpu.memory_space<vmem>>, %arg3: memref<8x128xi32, #tpu.memory_space<vmem>>, %arg4: memref<16x128xf32, #tpu.memory_space<vmem>>, %arg5: memref<16x128xf32, #tpu.memory_space<vmem>>) attributes {dimension_semantics = [#tpu.dimension_semantics<parallel>, #tpu.dimension_semantics<arbitrary>], iteration_bounds = array<i64: 1, 1>, scalar_prefetch = 0 : i64, scratch_operands = 1 : i64, tpu.core_type = #tpu.core_type<tc>, window_params = [{transform_indices = @transform_0, window_bounds = array<i64: 8, 128>}, {transform_indices = @transform_1, window_bounds = array<i64: 8, 128>}, {transform_indices = @transform_2, window_bounds = array<i64: 16, 128>}]} {
    %c0_i32 = arith.constant 0 : i32
    %0 = arith.cmpi eq, %arg1, %c0_i32 : i32
    %1 = arith.extui %0 : i1 to i32
    %c0_i32_0 = arith.constant 0 : i32
    %2 = arith.cmpi ne, %1, %c0_i32_0 : i32
    scf.if %2 {
      %cst_102 = arith.constant 0.000000e+00 : f32
      %162 = vector.broadcast %cst_102 : f32 to vector<16x128xf32>
      %c0_103 = arith.constant 0 : index
      %c0_104 = arith.constant 0 : index
      %163 = vector.load %arg5[%c0_103, %c0_104] : memref<16x128xf32, #tpu.memory_space<vmem>>, vector<16x128xf32>
      tpu.vector_store %arg5[%c0_103, %c0_104], %162 {strides = array<i32>} : memref<16x128xf32, #tpu.memory_space<vmem>>, vector<16x128xf32>,
    } else {
    }
    %c0 = arith.constant 0 : index
    %c0_1 = arith.constant 0 : index
    %3 = vector.load %arg2[%c0, %c0_1] : memref<8x128xf32, #tpu.memory_space<vmem>>, vector<8x128xf32>
    %cst = arith.constant 5.000000e-01 : f32
    %4 = vector.broadcast %cst : f32 to vector<8x128xf32>
    %5 = arith.mulf %4, %3 : vector<8x128xf32>
    %6 = math.tanh %5 : vector<8x128xf32>
    %cst_2 = arith.constant 1.000000e+00 : f32
    %7 = vector.broadcast %cst_2 : f32 to vector<8x128xf32>
    %8 = arith.addf %6, %7 : vector<8x128xf32>
    %cst_3 = arith.constant 5.000000e-01 : f32
    %9 = vector.broadcast %cst_3 : f32 to vector<8x128xf32>
    %10 = arith.mulf %9, %8 : vector<8x128xf32>
    %cst_4 = arith.constant 5.000000e-01 : f32
    %11 = vector.broadcast %cst_4 : f32 to vector<8x128xf32>
    %12 = arith.cmpf ogt, %10, %11 : vector<8x128xf32>
    %13 = arith.extui %12 : vector<8x128xi1> to vector<8x128xi32>
    %c0_5 = arith.constant 0 : index
    %c0_6 = arith.constant 0 : index
    %14 = vector.load %arg3[%c0_5, %c0_6] : memref<8x128xi32, #tpu.memory_space<vmem>>, vector<8x128xi32>
    %15 = arith.cmpi eq, %13, %14 : vector<8x128xi32>
    %16 = arith.extui %15 : vector<8x128xi1> to vector<8x128xi32>
    %17 = arith.sitofp %16 : vector<8x128xi32> to vector<8x128xf32>
    %18 = arith.subf %10, %17 : vector<8x128xf32>
    %cst_7 = arith.constant 1.500000e+01 : f32
    %19 = vector.broadcast %cst_7 : f32 to vector<8x128xf32>
    %20 = arith.mulf %10, %19 : vector<8x128xf32>
    %21 = math.ceil %20 : vector<8x128xf32>
    %cst_8 = arith.constant 1.000000e+00 : f32
    %22 = vector.broadcast %cst_8 : f32 to vector<8x128xf32>
    %23 = arith.subf %21, %22 : vector<8x128xf32>
    %cst_9 = arith.constant 0.000000e+00 : f32
    %24 = vector.broadcast %cst_9 : f32 to vector<8x128xf32>
    %25 = arith.cmpf oeq, %23, %24 : vector<8x128xf32>
    %cst_10 = arith.constant 0.000000e+00 : f32
    %26 = vector.broadcast %cst_10 : f32 to vector<8x128xf32>
    %27 = arith.select %25, %18, %26 : vector<8x128xi1>, vector<8x128xf32>
    %c0_11 = arith.constant 0 : index
    %c0_12 = arith.constant 0 : index
    %28 = vector.load %arg5[%c0_11, %c0_12] : memref<16x128xf32, #tpu.memory_space<vmem>>, vector<1x128xf32>
    %cst_13 = arith.constant dense<0.000000e+00> : vector<128xf32>
    %29 = vector.multi_reduction <add>, %27, %cst_13 [0] : vector<8x128xf32> to vector<128xf32>
    %30 = vector.shape_cast %29 : vector<128xf32> to vector<1x128xf32>
    %31 = arith.addf %28, %30 : vector<1x128xf32>
    %c0_14 = arith.constant 0 : index
    %c0_15 = arith.constant 0 : index
    %32 = vector.load %arg5[%c0_14, %c0_15] : memref<16x128xf32, #tpu.memory_space<vmem>>, vector<1x128xf32>
    tpu.vector_store %arg5[%c0_14, %c0_15], %31 {strides = array<i32>} : memref<16x128xf32, #tpu.memory_space<vmem>>, vector<1x128xf32>,
    %cst_16 = arith.constant 1.000000e+00 : f32
    %33 = vector.broadcast %cst_16 : f32 to vector<8x128xf32>
    %34 = arith.cmpf oeq, %23, %33 : vector<8x128xf32>
    %cst_17 = arith.constant 0.000000e+00 : f32
    %35 = vector.broadcast %cst_17 : f32 to vector<8x128xf32>
    %36 = arith.select %34, %18, %35 : vector<8x128xi1>, vector<8x128xf32>
    %c1 = arith.constant 1 : index
    %c0_18 = arith.constant 0 : index
    %37 = vector.load %arg5[%c1, %c0_18] : memref<16x128xf32, #tpu.memory_space<vmem>>, vector<1x128xf32>
    %cst_19 = arith.constant dense<0.000000e+00> : vector<128xf32>
    %38 = vector.multi_reduction <add>, %36, %cst_19 [0] : vector<8x128xf32> to vector<128xf32>
    %39 = vector.shape_cast %38 : vector<128xf32> to vector<1x128xf32>
    %40 = arith.addf %37, %39 : vector<1x128xf32>
    %c1_20 = arith.constant 1 : index
    %c0_21 = arith.constant 0 : index
    %41 = vector.load %arg5[%c1_20, %c0_21] : memref<16x128xf32, #tpu.memory_space<vmem>>, vector<1x128xf32>
    tpu.vector_store %arg5[%c1_20, %c0_21], %40 {strides = array<i32>} : memref<16x128xf32, #tpu.memory_space<vmem>>, vector<1x128xf32>,
    %cst_22 = arith.constant 2.000000e+00 : f32
    %42 = vector.broadcast %cst_22 : f32 to vector<8x128xf32>
    %43 = arith.cmpf oeq, %23, %42 : vector<8x128xf32>
    %cst_23 = arith.constant 0.000000e+00 : f32
    %44 = vector.broadcast %cst_23 : f32 to vector<8x128xf32>
    %45 = arith.select %43, %18, %44 : vector<8x128xi1>, vector<8x128xf32>
    %c2 = arith.constant 2 : index
    %c0_24 = arith.constant 0 : index
    %46 = vector.load %arg5[%c2, %c0_24] : memref<16x128xf32, #tpu.memory_space<vmem>>, vector<1x128xf32>
    %cst_25 = arith.constant dense<0.000000e+00> : vector<128xf32>
    %47 = vector.multi_reduction <add>, %45, %cst_25 [0] : vector<8x128xf32> to vector<128xf32>
    %48 = vector.shape_cast %47 : vector<128xf32> to vector<1x128xf32>
    %49 = arith.addf %46, %48 : vector<1x128xf32>
    %c2_26 = arith.constant 2 : index
    %c0_27 = arith.constant 0 : index
    %50 = vector.load %arg5[%c2_26, %c0_27] : memref<16x128xf32, #tpu.memory_space<vmem>>, vector<1x128xf32>
    tpu.vector_store %arg5[%c2_26, %c0_27], %49 {strides = array<i32>} : memref<16x128xf32, #tpu.memory_space<vmem>>, vector<1x128xf32>,
    %cst_28 = arith.constant 3.000000e+00 : f32
    %51 = vector.broadcast %cst_28 : f32 to vector<8x128xf32>
    %52 = arith.cmpf oeq, %23, %51 : vector<8x128xf32>
    %cst_29 = arith.constant 0.000000e+00 : f32
    %53 = vector.broadcast %cst_29 : f32 to vector<8x128xf32>
    %54 = arith.select %52, %18, %53 : vector<8x128xi1>, vector<8x128xf32>
    %c3 = arith.constant 3 : index
    %c0_30 = arith.constant 0 : index
    %55 = vector.load %arg5[%c3, %c0_30] : memref<16x128xf32, #tpu.memory_space<vmem>>, vector<1x128xf32>
    %cst_31 = arith.constant dense<0.000000e+00> : vector<128xf32>
    %56 = vector.multi_reduction <add>, %54, %cst_31 [0] : vector<8x128xf32> to vector<128xf32>
    %57 = vector.shape_cast %56 : vector<128xf32> to vector<1x128xf32>
    %58 = arith.addf %55, %57 : vector<1x128xf32>
    %c3_32 = arith.constant 3 : index
    %c0_33 = arith.constant 0 : index
    %59 = vector.load %arg5[%c3_32, %c0_33] : memref<16x128xf32, #tpu.memory_space<vmem>>, vector<1x128xf32>
    tpu.vector_store %arg5[%c3_32, %c0_33], %58 {strides = array<i32>} : memref<16x128xf32, #tpu.memory_space<vmem>>, vector<1x128xf32>,
    %cst_34 = arith.constant 4.000000e+00 : f32
    %60 = vector.broadcast %cst_34 : f32 to vector<8x128xf32>
    %61 = arith.cmpf oeq, %23, %60 : vector<8x128xf32>
    %cst_35 = arith.constant 0.000000e+00 : f32
    %62 = vector.broadcast %cst_35 : f32 to vector<8x128xf32>
    %63 = arith.select %61, %18, %62 : vector<8x128xi1>, vector<8x128xf32>
    %c4 = arith.constant 4 : index
    %c0_36 = arith.constant 0 : index
    %64 = vector.load %arg5[%c4, %c0_36] : memref<16x128xf32, #tpu.memory_space<vmem>>, vector<1x128xf32>
    %cst_37 = arith.constant dense<0.000000e+00> : vector<128xf32>
    %65 = vector.multi_reduction <add>, %63, %cst_37 [0] : vector<8x128xf32> to vector<128xf32>
    %66 = vector.shape_cast %65 : vector<128xf32> to vector<1x128xf32>
    %67 = arith.addf %64, %66 : vector<1x128xf32>
    %c4_38 = arith.constant 4 : index
    %c0_39 = arith.constant 0 : index
    %68 = vector.load %arg5[%c4_38, %c0_39] : memref<16x128xf32, #tpu.memory_space<vmem>>, vector<1x128xf32>
    tpu.vector_store %arg5[%c4_38, %c0_39], %67 {strides = array<i32>} : memref<16x128xf32, #tpu.memory_space<vmem>>, vector<1x128xf32>,
    %cst_40 = arith.constant 5.000000e+00 : f32
    %69 = vector.broadcast %cst_40 : f32 to vector<8x128xf32>
    %70 = arith.cmpf oeq, %23, %69 : vector<8x128xf32>
    %cst_41 = arith.constant 0.000000e+00 : f32
    %71 = vector.broadcast %cst_41 : f32 to vector<8x128xf32>
    %72 = arith.select %70, %18, %71 : vector<8x128xi1>, vector<8x128xf32>
    %c5 = arith.constant 5 : index
    %c0_42 = arith.constant 0 : index
    %73 = vector.load %arg5[%c5, %c0_42] : memref<16x128xf32, #tpu.memory_space<vmem>>, vector<1x128xf32>
    %cst_43 = arith.constant dense<0.000000e+00> : vector<128xf32>
    %74 = vector.multi_reduction <add>, %72, %cst_43 [0] : vector<8x128xf32> to vector<128xf32>
    %75 = vector.shape_cast %74 : vector<128xf32> to vector<1x128xf32>
    %76 = arith.addf %73, %75 : vector<1x128xf32>
    %c5_44 = arith.constant 5 : index
    %c0_45 = arith.constant 0 : index
    %77 = vector.load %arg5[%c5_44, %c0_45] : memref<16x128xf32, #tpu.memory_space<vmem>>, vector<1x128xf32>
    tpu.vector_store %arg5[%c5_44, %c0_45], %76 {strides = array<i32>} : memref<16x128xf32, #tpu.memory_space<vmem>>, vector<1x128xf32>,
    %cst_46 = arith.constant 6.000000e+00 : f32
    %78 = vector.broadcast %cst_46 : f32 to vector<8x128xf32>
    %79 = arith.cmpf oeq, %23, %78 : vector<8x128xf32>
    %cst_47 = arith.constant 0.000000e+00 : f32
    %80 = vector.broadcast %cst_47 : f32 to vector<8x128xf32>
    %81 = arith.select %79, %18, %80 : vector<8x128xi1>, vector<8x128xf32>
    %c6 = arith.constant 6 : index
    %c0_48 = arith.constant 0 : index
    %82 = vector.load %arg5[%c6, %c0_48] : memref<16x128xf32, #tpu.memory_space<vmem>>, vector<1x128xf32>
    %cst_49 = arith.constant dense<0.000000e+00> : vector<128xf32>
    %83 = vector.multi_reduction <add>, %81, %cst_49 [0] : vector<8x128xf32> to vector<128xf32>
    %84 = vector.shape_cast %83 : vector<128xf32> to vector<1x128xf32>
    %85 = arith.addf %82, %84 : vector<1x128xf32>
    %c6_50 = arith.constant 6 : index
    %c0_51 = arith.constant 0 : index
    %86 = vector.load %arg5[%c6_50, %c0_51] : memref<16x128xf32, #tpu.memory_space<vmem>>, vector<1x128xf32>
    tpu.vector_store %arg5[%c6_50, %c0_51], %85 {strides = array<i32>} : memref<16x128xf32, #tpu.memory_space<vmem>>, vector<1x128xf32>,
    %cst_52 = arith.constant 7.000000e+00 : f32
    %87 = vector.broadcast %cst_52 : f32 to vector<8x128xf32>
    %88 = arith.cmpf oeq, %23, %87 : vector<8x128xf32>
    %cst_53 = arith.constant 0.000000e+00 : f32
    %89 = vector.broadcast %cst_53 : f32 to vector<8x128xf32>
    %90 = arith.select %88, %18, %89 : vector<8x128xi1>, vector<8x128xf32>
    %c7 = arith.constant 7 : index
    %c0_54 = arith.constant 0 : index
    %91 = vector.load %arg5[%c7, %c0_54] : memref<16x128xf32, #tpu.memory_space<vmem>>, vector<1x128xf32>
    %cst_55 = arith.constant dense<0.000000e+00> : vector<128xf32>
    %92 = vector.multi_reduction <add>, %90, %cst_55 [0] : vector<8x128xf32> to vector<128xf32>
    %93 = vector.shape_cast %92 : vector<128xf32> to vector<1x128xf32>
    %94 = arith.addf %91, %93 : vector<1x128xf32>
    %c7_56 = arith.constant 7 : index
    %c0_57 = arith.constant 0 : index
    %95 = vector.load %arg5[%c7_56, %c0_57] : memref<16x128xf32, #tpu.memory_space<vmem>>, vector<1x128xf32>
    tpu.vector_store %arg5[%c7_56, %c0_57], %94 {strides = array<i32>} : memref<16x128xf32, #tpu.memory_space<vmem>>, vector<1x128xf32>,
    %cst_58 = arith.constant 8.000000e+00 : f32
    %96 = vector.broadcast %cst_58 : f32 to vector<8x128xf32>
    %97 = arith.cmpf oeq, %23, %96 : vector<8x128xf32>
    %cst_59 = arith.constant 0.000000e+00 : f32
    %98 = vector.broadcast %cst_59 : f32 to vector<8x128xf32>
    %99 = arith.select %97, %18, %98 : vector<8x128xi1>, vector<8x128xf32>
    %c8 = arith.constant 8 : index
    %c0_60 = arith.constant 0 : index
    %100 = vector.load %arg5[%c8, %c0_60] : memref<16x128xf32, #tpu.memory_space<vmem>>, vector<1x128xf32>
    %cst_61 = arith.constant dense<0.000000e+00> : vector<128xf32>
    %101 = vector.multi_reduction <add>, %99, %cst_61 [0] : vector<8x128xf32> to vector<128xf32>
    %102 = vector.shape_cast %101 : vector<128xf32> to vector<1x128xf32>
    %103 = arith.addf %100, %102 : vector<1x128xf32>
    %c8_62 = arith.constant 8 : index
    %c0_63 = arith.constant 0 : index
    %104 = vector.load %arg5[%c8_62, %c0_63] : memref<16x128xf32, #tpu.memory_space<vmem>>, vector<1x128xf32>
    tpu.vector_store %arg5[%c8_62, %c0_63], %103 {strides = array<i32>} : memref<16x128xf32, #tpu.memory_space<vmem>>, vector<1x128xf32>,
    %cst_64 = arith.constant 9.000000e+00 : f32
    %105 = vector.broadcast %cst_64 : f32 to vector<8x128xf32>
    %106 = arith.cmpf oeq, %23, %105 : vector<8x128xf32>
    %cst_65 = arith.constant 0.000000e+00 : f32
    %107 = vector.broadcast %cst_65 : f32 to vector<8x128xf32>
    %108 = arith.select %106, %18, %107 : vector<8x128xi1>, vector<8x128xf32>
    %c9 = arith.constant 9 : index
    %c0_66 = arith.constant 0 : index
    %109 = vector.load %arg5[%c9, %c0_66] : memref<16x128xf32, #tpu.memory_space<vmem>>, vector<1x128xf32>
    %cst_67 = arith.constant dense<0.000000e+00> : vector<128xf32>
    %110 = vector.multi_reduction <add>, %108, %cst_67 [0] : vector<8x128xf32> to vector<128xf32>
    %111 = vector.shape_cast %110 : vector<128xf32> to vector<1x128xf32>
    %112 = arith.addf %109, %111 : vector<1x128xf32>
    %c9_68 = arith.constant 9 : index
    %c0_69 = arith.constant 0 : index
    %113 = vector.load %arg5[%c9_68, %c0_69] : memref<16x128xf32, #tpu.memory_space<vmem>>, vector<1x128xf32>
    tpu.vector_store %arg5[%c9_68, %c0_69], %112 {strides = array<i32>} : memref<16x128xf32, #tpu.memory_space<vmem>>, vector<1x128xf32>,
    %cst_70 = arith.constant 1.000000e+01 : f32
    %114 = vector.broadcast %cst_70 : f32 to vector<8x128xf32>
    %115 = arith.cmpf oeq, %23, %114 : vector<8x128xf32>
    %cst_71 = arith.constant 0.000000e+00 : f32
    %116 = vector.broadcast %cst_71 : f32 to vector<8x128xf32>
    %117 = arith.select %115, %18, %116 : vector<8x128xi1>, vector<8x128xf32>
    %c10 = arith.constant 10 : index
    %c0_72 = arith.constant 0 : index
    %118 = vector.load %arg5[%c10, %c0_72] : memref<16x128xf32, #tpu.memory_space<vmem>>, vector<1x128xf32>
    %cst_73 = arith.constant dense<0.000000e+00> : vector<128xf32>
    %119 = vector.multi_reduction <add>, %117, %cst_73 [0] : vector<8x128xf32> to vector<128xf32>
    %120 = vector.shape_cast %119 : vector<128xf32> to vector<1x128xf32>
    %121 = arith.addf %118, %120 : vector<1x128xf32>
    %c10_74 = arith.constant 10 : index
    %c0_75 = arith.constant 0 : index
    %122 = vector.load %arg5[%c10_74, %c0_75] : memref<16x128xf32, #tpu.memory_space<vmem>>, vector<1x128xf32>
    tpu.vector_store %arg5[%c10_74, %c0_75], %121 {strides = array<i32>} : memref<16x128xf32, #tpu.memory_space<vmem>>, vector<1x128xf32>,
    %cst_76 = arith.constant 1.100000e+01 : f32
    %123 = vector.broadcast %cst_76 : f32 to vector<8x128xf32>
    %124 = arith.cmpf oeq, %23, %123 : vector<8x128xf32>
    %cst_77 = arith.constant 0.000000e+00 : f32
    %125 = vector.broadcast %cst_77 : f32 to vector<8x128xf32>
    %126 = arith.select %124, %18, %125 : vector<8x128xi1>, vector<8x128xf32>
    %c11 = arith.constant 11 : index
    %c0_78 = arith.constant 0 : index
    %127 = vector.load %arg5[%c11, %c0_78] : memref<16x128xf32, #tpu.memory_space<vmem>>, vector<1x128xf32>
    %cst_79 = arith.constant dense<0.000000e+00> : vector<128xf32>
    %128 = vector.multi_reduction <add>, %126, %cst_79 [0] : vector<8x128xf32> to vector<128xf32>
    %129 = vector.shape_cast %128 : vector<128xf32> to vector<1x128xf32>
    %130 = arith.addf %127, %129 : vector<1x128xf32>
    %c11_80 = arith.constant 11 : index
    %c0_81 = arith.constant 0 : index
    %131 = vector.load %arg5[%c11_80, %c0_81] : memref<16x128xf32, #tpu.memory_space<vmem>>, vector<1x128xf32>
    tpu.vector_store %arg5[%c11_80, %c0_81], %130 {strides = array<i32>} : memref<16x128xf32, #tpu.memory_space<vmem>>, vector<1x128xf32>,
    %cst_82 = arith.constant 1.200000e+01 : f32
    %132 = vector.broadcast %cst_82 : f32 to vector<8x128xf32>
    %133 = arith.cmpf oeq, %23, %132 : vector<8x128xf32>
    %cst_83 = arith.constant 0.000000e+00 : f32
    %134 = vector.broadcast %cst_83 : f32 to vector<8x128xf32>
    %135 = arith.select %133, %18, %134 : vector<8x128xi1>, vector<8x128xf32>
    %c12 = arith.constant 12 : index
    %c0_84 = arith.constant 0 : index
    %136 = vector.load %arg5[%c12, %c0_84] : memref<16x128xf32, #tpu.memory_space<vmem>>, vector<1x128xf32>
    %cst_85 = arith.constant dense<0.000000e+00> : vector<128xf32>
    %137 = vector.multi_reduction <add>, %135, %cst_85 [0] : vector<8x128xf32> to vector<128xf32>
    %138 = vector.shape_cast %137 : vector<128xf32> to vector<1x128xf32>
    %139 = arith.addf %136, %138 : vector<1x128xf32>
    %c12_86 = arith.constant 12 : index
    %c0_87 = arith.constant 0 : index
    %140 = vector.load %arg5[%c12_86, %c0_87] : memref<16x128xf32, #tpu.memory_space<vmem>>, vector<1x128xf32>
    tpu.vector_store %arg5[%c12_86, %c0_87], %139 {strides = array<i32>} : memref<16x128xf32, #tpu.memory_space<vmem>>, vector<1x128xf32>,
    %cst_88 = arith.constant 1.300000e+01 : f32
    %141 = vector.broadcast %cst_88 : f32 to vector<8x128xf32>
    %142 = arith.cmpf oeq, %23, %141 : vector<8x128xf32>
    %cst_89 = arith.constant 0.000000e+00 : f32
    %143 = vector.broadcast %cst_89 : f32 to vector<8x128xf32>
    %144 = arith.select %142, %18, %143 : vector<8x128xi1>, vector<8x128xf32>
    %c13 = arith.constant 13 : index
    %c0_90 = arith.constant 0 : index
    %145 = vector.load %arg5[%c13, %c0_90] : memref<16x128xf32, #tpu.memory_space<vmem>>, vector<1x128xf32>
    %cst_91 = arith.constant dense<0.000000e+00> : vector<128xf32>
    %146 = vector.multi_reduction <add>, %144, %cst_91 [0] : vector<8x128xf32> to vector<128xf32>
    %147 = vector.shape_cast %146 : vector<128xf32> to vector<1x128xf32>
    %148 = arith.addf %145, %147 : vector<1x128xf32>
    %c13_92 = arith.constant 13 : index
    %c0_93 = arith.constant 0 : index
    %149 = vector.load %arg5[%c13_92, %c0_93] : memref<16x128xf32, #tpu.memory_space<vmem>>, vector<1x128xf32>
    tpu.vector_store %arg5[%c13_92, %c0_93], %148 {strides = array<i32>} : memref<16x128xf32, #tpu.memory_space<vmem>>, vector<1x128xf32>,
    %cst_94 = arith.constant 1.400000e+01 : f32
    %150 = vector.broadcast %cst_94 : f32 to vector<8x128xf32>
    %151 = arith.cmpf oeq, %23, %150 : vector<8x128xf32>
    %cst_95 = arith.constant 0.000000e+00 : f32
    %152 = vector.broadcast %cst_95 : f32 to vector<8x128xf32>
    %153 = arith.select %151, %18, %152 : vector<8x128xi1>, vector<8x128xf32>
    %c14 = arith.constant 14 : index
    %c0_96 = arith.constant 0 : index
    %154 = vector.load %arg5[%c14, %c0_96] : memref<16x128xf32, #tpu.memory_space<vmem>>, vector<1x128xf32>
    %cst_97 = arith.constant dense<0.000000e+00> : vector<128xf32>
    %155 = vector.multi_reduction <add>, %153, %cst_97 [0] : vector<8x128xf32> to vector<128xf32>
    %156 = vector.shape_cast %155 : vector<128xf32> to vector<1x128xf32>
    %157 = arith.addf %154, %156 : vector<1x128xf32>
    %c14_98 = arith.constant 14 : index
    %c0_99 = arith.constant 0 : index
    %158 = vector.load %arg5[%c14_98, %c0_99] : memref<16x128xf32, #tpu.memory_space<vmem>>, vector<1x128xf32>
    tpu.vector_store %arg5[%c14_98, %c0_99], %157 {strides = array<i32>} : memref<16x128xf32, #tpu.memory_space<vmem>>, vector<1x128xf32>,
    %c0_i32_100 = arith.constant 0 : i32
    %159 = arith.cmpi eq, %arg1, %c0_i32_100 : i32
    %160 = arith.extui %159 : i1 to i32
    %c0_i32_101 = arith.constant 0 : i32
    %161 = arith.cmpi ne, %160, %c0_i32_101 : i32
    scf.if %161 {
      %c0_102 = arith.constant 0 : index
      %c0_103 = arith.constant 0 : index
      %162 = vector.load %arg5[%c0_102, %c0_103] : memref<16x128xf32, #tpu.memory_space<vmem>>, vector<16x128xf32>
      %c0_104 = arith.constant 0 : index
      %c0_105 = arith.constant 0 : index
      %163 = vector.load %arg4[%c0_104, %c0_105] : memref<16x128xf32, #tpu.memory_space<vmem>>, vector<16x128xf32>
      tpu.vector_store %arg4[%c0_104, %c0_105], %162 {strides = array<i32>} : memref<16x128xf32, #tpu.memory_space<vmem>>, vector<16x128xf32>,
    } else {
    }
    return
  }
  func.func @transform_0(%arg0: i32, %arg1: i32) -> (i32, i32) {
    %c1_i32 = arith.constant 1 : i32
    %0 = arith.muli %arg0, %c1_i32 : i32
    %1 = arith.addi %0, %arg1 : i32
    %c0_i32 = arith.constant 0 : i32
    %c0_i32_0 = arith.constant 0 : i32
    return %1, %c0_i32 : i32, i32
  }
  func.func @transform_1(%arg0: i32, %arg1: i32) -> (i32, i32) {
    %c1_i32 = arith.constant 1 : i32
    %0 = arith.muli %arg0, %c1_i32 : i32
    %1 = arith.addi %0, %arg1 : i32
    %c0_i32 = arith.constant 0 : i32
    %c0_i32_0 = arith.constant 0 : i32
    return %1, %c0_i32 : i32, i32
  }
  func.func @transform_2(%arg0: i32, %arg1: i32) -> (i32, i32) {
    %c0_i32 = arith.constant 0 : i32
    %c0_i32_0 = arith.constant 0 : i32
    return %arg0, %c0_i32 : i32, i32
  }
}

</mosaic_0001>

<llo_original>
// kernel: tpu_custom_call.1
$region0: #{tpu_custom_call.1}
  #allocation0 [shape = 'u32[]', space=smem, size = 0x4, offset = 0x4, fixed_abs, tag = 'smem constant byte address 0x4 - core index']
  #allocation1 [shape = 'u32[72,128]{1,0:T(1,128)}', space=vmem, size = 0x9000, scoped, tag = 'internal scratch']
  #allocation2 [shape = 'f32[16,128]{1,0:T(8,128)}', space=vmem, size = 0x2000, scoped, tag = 'scratch operand']
  %s0 = inlined_call_operand.hbm [shape: f32[8,128], index: 0, kind: input, shape index: {}]
  %s1 = inlined_call_operand.hbm [shape: s32[8,128], index: 1, kind: input, shape index: {}]
  %s2 = inlined_call_operand.hbm [shape: f32[16,128], index: 2, kind: output, shape index: {}]
  %s3 = sld [smem:[#allocation0]]
  $region34: #{tpu_custom_call.1} parent=0
    _
  %s5 = ssub.s32 1, %s3
  %s6 = scalar_select 0, %s5, %s3
  $region1: #{tpu_custom_call.1} parent=0
    #allocation3 [shape = 'u8[4096]{0}', space=vmem, size = 0x1000, scoped, tag = 'input window, operand 0, single buffered']
    #allocation4 [shape = 's32[1]{0}', space=sflag, size = 0x4, scoped, tag = 'scoped memory for tpu_custom_call.1']
    #allocation5 [shape = 's32[1]{0}', space=sflag, size = 0x4, scoped, tag = 'scoped memory for tpu_custom_call.1']
    #allocation6 [shape = 'u8[4096]{0}', space=vmem, size = 0x1000, scoped, tag = 'input window, operand 1, single buffered']
    #allocation7 [shape = 's32[1]{0}', space=sflag, size = 0x4, scoped, tag = 'scoped memory for tpu_custom_call.1']
    #allocation8 [shape = 'u8[8192]{0}', space=vmem, size = 0x2000, scoped, tag = 'output window, operand 0, single buffered']
    %7 = vsyncpa [#allocation4], 0
    %8 = vsyncpa [#allocation7], 0
    %9 = vsyncpa [#allocation5], 0
    // Predicated region
    $region2: #{tpu_custom_call.1} parent=1 // pred_check
      _
    $region3: #{tpu_custom_call.1} parent=1 // pred_check_branch
      %11 = sbr.rel (0) target = $region5
    $region4: #{tpu_custom_call.1} parent=1 // pred_region
      %s12 = sadd.s32 0, 0
      %14 = vsyncadd [#allocation4], 0
      %s15 = smul.addr %s12, 8
      %s16 = scalar_lea.hbm %s0, %s15
      %s18 = sshll.u32 %s16, 4
      %s19 = int_to_ptr.hbm [resolvable:$true] %s18
      %s20 = sshll.u32 [#allocation3], 4
      %s21 = int_to_ptr.vmem [resolvable:$true] %s20
      %23 = dma.hbm_to_vmem [thread:$0]  %s19, 128, %s21, [#allocation4]
    $region5: #{tpu_custom_call.1} parent=1 // pred_fallthru
      _
    // Predicated region
    $region6: #{tpu_custom_call.1} parent=1 // pred_check
      _
    $region7: #{tpu_custom_call.1} parent=1 // pred_check_branch
      %25 = sbr.rel (0) target = $region9
    $region8: #{tpu_custom_call.1} parent=1 // pred_region
      %s26 = sadd.s32 0, 0
      %28 = vsyncadd [#allocation7], 0
      %s29 = smul.addr %s26, 8
      %s30 = scalar_lea.hbm %s1, %s29
      %s32 = sshll.u32 %s30, 4
      %s33 = int_to_ptr.hbm [resolvable:$true] %s32
      %s34 = sshll.u32 [#allocation6], 4
      %s35 = int_to_ptr.vmem [resolvable:$true] %s34
      %37 = dma.hbm_to_vmem [thread:$0]  %s33, 128, %s35, [#allocation7]
    $region9: #{tpu_custom_call.1} parent=1 // pred_fallthru
      _
    // Predicated region
    $region10: #{tpu_custom_call.1} parent=1 // pred_check
      _
    $region11: #{tpu_custom_call.1} parent=1 // pred_check_branch
      %39 = sbr.rel (0) target = $region13
    $region12: #{tpu_custom_call.1} parent=1 // pred_region
      %41 = dma.done [#allocation4], 128
    $region13: #{tpu_custom_call.1} parent=1 // pred_fallthru
      _
    // Predicated region
    $region14: #{tpu_custom_call.1} parent=1 // pred_check
      _
    $region15: #{tpu_custom_call.1} parent=1 // pred_check_branch
      %43 = sbr.rel (0) target = $region17
    $region16: #{tpu_custom_call.1} parent=1 // pred_region
      %45 = dma.done [#allocation7], 128
    $region17: #{tpu_custom_call.1} parent=1 // pred_fallthru
      _
    %s46 = sadd.s32 0, 0
    %s47 = sadd.s32 0, 0
    %p48 = scmp.eq.s32.totalorder 0, 0
    // Predicated region
    $region18: #{tpu_custom_call.1} parent=1 // pred_check
      %p49 = pneg %p48
    $region19: #{tpu_custom_call.1} parent=1 // pred_check_branch
      %51 = sbr.rel (%p49) target = $region21
    $region20: #{tpu_custom_call.1} parent=1 // pred_region
      %52 = vst [vmem:[#allocation2] sm:$0xff] 0.0
      %53 = vst [vmem:[#allocation2 + $0x8] sm:$0xff] 0.0
    $region21: #{tpu_custom_call.1} parent=1 // pred_fallthru
      _
    %v54 = vld [vmem:[#allocation3] sm:$0xff]
    %v55 = vmul.f32 %v54, 0.5
    %v56 = vtanh.pop %v55
    %v57 = vadd.f32 %v56, 1.0
    %v58 = vmul.f32 %v57, 0.5
    %vm59 = vcmp.gt.f32.partialorder %v58, 0.5
    %v60 = vsel %vm59, 1, 0
    %v61 = vld [vmem:[#allocation6] sm:$0xff]
    %vm62 = vcmp.eq.s32.totalorder %v60, %v61
    %v63 = vsel %vm62, 1, 0
    %v64 = vcvt.s32.f32 %v63
    %v65 = vsub.f32 %v58, %v64
    %v66 = vmul.f32 %v58, 15.0
    %v67 = vceil.f32 %v66
    %v68 = vsub.f32 %v67, 1.0
    %vm69 = vcmp.eq.f32.partialorder %v68, 0.0
    %v70 = vsel %vm69, %v65, 0.0
    %v71 = vld [vmem:[#allocation2] sm:$0x1]
    %v72 = vrot.slane %v70, 4
    %v73 = vadd.f32 %v70, %v72
    %v74 = vrot.slane %v73, 2
    %v75 = vadd.f32 %v73, %v74
    %v76 = vrot.slane %v75, 1
    %v77 = vadd.f32 %v75, %v76
    %v78 = vadd.f32 %v71, %v77
    %79 = vst [vmem:[#allocation2] sm:$0x1] %v78
    %vm80 = vcmp.eq.f32.partialorder %v68, 1.0
    %v81 = vsel %vm80, %v65, 0.0
    %v82 = vld [vmem:[#allocation2 + $0x1] sm:$0x1]
    %v83 = vrot.slane %v81, 4
    %v84 = vadd.f32 %v81, %v83
    %v85 = vrot.slane %v84, 2
    %v86 = vadd.f32 %v84, %v85
    %v87 = vrot.slane %v86, 1
    %v88 = vadd.f32 %v86, %v87
    %v89 = vadd.f32 %v82, %v88
    %90 = vst [vmem:[#allocation2 + $0x1] sm:$0x1] %v89
    %vm91 = vcmp.eq.f32.partialorder %v68, 2.0
    %v92 = vsel %vm91, %v65, 0.0
    %v93 = vld [vmem:[#allocation2 + $0x2] sm:$0x1]
    %v94 = vrot.slane %v92, 4
    %v95 = vadd.f32 %v92, %v94
    %v96 = vrot.slane %v95, 2
    %v97 = vadd.f32 %v95, %v96
    %v98 = vrot.slane %v97, 1
    %v99 = vadd.f32 %v97, %v98
    %v100 = vadd.f32 %v93, %v99
    %101 = vst [vmem:[#allocation2 + $0x2] sm:$0x1] %v100
    %vm102 = vcmp.eq.f32.partialorder %v68, 3.0
    %v103 = vsel %vm102, %v65, 0.0
    %v104 = vld [vmem:[#allocation2 + $0x3] sm:$0x1]
    %v105 = vrot.slane %v103, 4
    %v106 = vadd.f32 %v103, %v105
    %v107 = vrot.slane %v106, 2
    %v108 = vadd.f32 %v106, %v107
    %v109 = vrot.slane %v108, 1
    %v110 = vadd.f32 %v108, %v109
    %v111 = vadd.f32 %v104, %v110
    %112 = vst [vmem:[#allocation2 + $0x3] sm:$0x1] %v111
    %vm113 = vcmp.eq.f32.partialorder %v68, 4.0
    %v114 = vsel %vm113, %v65, 0.0
    %v115 = vld [vmem:[#allocation2 + $0x4] sm:$0x1]
    %v116 = vrot.slane %v114, 4
    %v117 = vadd.f32 %v114, %v116
    %v118 = vrot.slane %v117, 2
    %v119 = vadd.f32 %v117, %v118
    %v120 = vrot.slane %v119, 1
    %v121 = vadd.f32 %v119, %v120
    %v122 = vadd.f32 %v115, %v121
    %123 = vst [vmem:[#allocation2 + $0x4] sm:$0x1] %v122
    %vm124 = vcmp.eq.f32.partialorder %v68, 5.0
    %v125 = vsel %vm124, %v65, 0.0
    %v126 = vld [vmem:[#allocation2 + $0x5] sm:$0x1]
    %v127 = vrot.slane %v125, 4
    %v128 = vadd.f32 %v125, %v127
    %v129 = vrot.slane %v128, 2
    %v130 = vadd.f32 %v128, %v129
    %v131 = vrot.slane %v130, 1
    %v132 = vadd.f32 %v130, %v131
    %v133 = vadd.f32 %v126, %v132
    %134 = vst [vmem:[#allocation2 + $0x5] sm:$0x1] %v133
    %vm135 = vcmp.eq.f32.partialorder %v68, 6.0
    %v136 = vsel %vm135, %v65, 0.0
    %v137 = vld [vmem:[#allocation2 + $0x6] sm:$0x1]
    %v138 = vrot.slane %v136, 4
    %v139 = vadd.f32 %v136, %v138
    %v140 = vrot.slane %v139, 2
    %v141 = vadd.f32 %v139, %v140
    %v142 = vrot.slane %v141, 1
    %v143 = vadd.f32 %v141, %v142
    %v144 = vadd.f32 %v137, %v143
    %145 = vst [vmem:[#allocation2 + $0x6] sm:$0x1] %v144
    %vm146 = vcmp.eq.f32.partialorder %v68, 7.0
    %v147 = vsel %vm146, %v65, 0.0
    %v148 = vld [vmem:[#allocation2 + $0x7] sm:$0x1]
    %v149 = vrot.slane %v147, 4
    %v150 = vadd.f32 %v147, %v149
    %v151 = vrot.slane %v150, 2
    %v152 = vadd.f32 %v150, %v151
    %v153 = vrot.slane %v152, 1
    %v154 = vadd.f32 %v152, %v153
    %v155 = vadd.f32 %v148, %v154
    %156 = vst [vmem:[#allocation2 + $0x7] sm:$0x1] %v155
    %vm157 = vcmp.eq.f32.partialorder %v68, 8.0
    %v158 = vsel %vm157, %v65, 0.0
    %v159 = vld [vmem:[#allocation2 + $0x8] sm:$0x1]
    %v160 = vrot.slane %v158, 4
    %v161 = vadd.f32 %v158, %v160
    %v162 = vrot.slane %v161, 2
    %v163 = vadd.f32 %v161, %v162
    %v164 = vrot.slane %v163, 1
    %v165 = vadd.f32 %v163, %v164
    %v166 = vadd.f32 %v159, %v165
    %167 = vst [vmem:[#allocation2 + $0x8] sm:$0x1] %v166
    %vm168 = vcmp.eq.f32.partialorder %v68, 9.0
    %v169 = vsel %vm168, %v65, 0.0
    %v170 = vld [vmem:[#allocation2 + $0x9] sm:$0x1]
    %v171 = vrot.slane %v169, 4
    %v172 = vadd.f32 %v169, %v171
    %v173 = vrot.slane %v172, 2
    %v174 = vadd.f32 %v172, %v173
    %v175 = vrot.slane %v174, 1
    %v176 = vadd.f32 %v174, %v175
    %v177 = vadd.f32 %v170, %v176
    %178 = vst [vmem:[#allocation2 + $0x9] sm:$0x1] %v177
    %vm179 = vcmp.eq.f32.partialorder %v68, 10.0
    %v180 = vsel %vm179, %v65, 0.0
    %v181 = vld [vmem:[#allocation2 + $0xa] sm:$0x1]
    %v182 = vrot.slane %v180, 4
    %v183 = vadd.f32 %v180, %v182
    %v184 = vrot.slane %v183, 2
    %v185 = vadd.f32 %v183, %v184
    %v186 = vrot.slane %v185, 1
    %v187 = vadd.f32 %v185, %v186
    %v188 = vadd.f32 %v181, %v187
    %189 = vst [vmem:[#allocation2 + $0xa] sm:$0x1] %v188
    %vm190 = vcmp.eq.f32.partialorder %v68, 11.0
    %v191 = vsel %vm190, %v65, 0.0
    %v192 = vld [vmem:[#allocation2 + $0xb] sm:$0x1]
    %v193 = vrot.slane %v191, 4
    %v194 = vadd.f32 %v191, %v193
    %v195 = vrot.slane %v194, 2
    %v196 = vadd.f32 %v194, %v195
    %v197 = vrot.slane %v196, 1
    %v198 = vadd.f32 %v196, %v197
    %v199 = vadd.f32 %v192, %v198
    %200 = vst [vmem:[#allocation2 + $0xb] sm:$0x1] %v199
    %vm201 = vcmp.eq.f32.partialorder %v68, 12.0
    %v202 = vsel %vm201, %v65, 0.0
    %v203 = vld [vmem:[#allocation2 + $0xc] sm:$0x1]
    %v204 = vrot.slane %v202, 4
    %v205 = vadd.f32 %v202, %v204
    %v206 = vrot.slane %v205, 2
    %v207 = vadd.f32 %v205, %v206
    %v208 = vrot.slane %v207, 1
    %v209 = vadd.f32 %v207, %v208
    %v210 = vadd.f32 %v203, %v209
    %211 = vst [vmem:[#allocation2 + $0xc] sm:$0x1] %v210
    %vm212 = vcmp.eq.f32.partialorder %v68, 13.0
    %v213 = vsel %vm212, %v65, 0.0
    %v214 = vld [vmem:[#allocation2 + $0xd] sm:$0x1]
    %v215 = vrot.slane %v213, 4
    %v216 = vadd.f32 %v213, %v215
    %v217 = vrot.slane %v216, 2
    %v218 = vadd.f32 %v216, %v217
    %v219 = vrot.slane %v218, 1
    %v220 = vadd.f32 %v218, %v219
    %v221 = vadd.f32 %v214, %v220
    %222 = vst [vmem:[#allocation2 + $0xd] sm:$0x1] %v221
    %vm223 = vcmp.eq.f32.partialorder %v68, 14.0
    %v224 = vsel %vm223, %v65, 0.0
    %v225 = vld [vmem:[#allocation2 + $0xe] sm:$0x1]
    %v226 = vrot.slane %v224, 4
    %v227 = vadd.f32 %v224, %v226
    %v228 = vrot.slane %v227, 2
    %v229 = vadd.f32 %v227, %v228
    %v230 = vrot.slane %v229, 1
    %v231 = vadd.f32 %v229, %v230
    %v232 = vadd.f32 %v225, %v231
    %233 = vst [vmem:[#allocation2 + $0xe] sm:$0x1] %v232
    // Predicated region
    $region22: #{tpu_custom_call.1} parent=1 // pred_check
      %p234 = pneg %p48
    $region23: #{tpu_custom_call.1} parent=1 // pred_check_branch
      %236 = sbr.rel (%p234) target = $region25
    $region24: #{tpu_custom_call.1} parent=1 // pred_region
      %v237 = vld [vmem:[#allocation2] sm:$0xff]
      %v238 = vld [vmem:[#allocation2 + $0x8] sm:$0xff]
      %239 = vst [vmem:[#allocation8] sm:$0xff] %v237
      %240 = vst [vmem:[#allocation8 + $0x8] sm:$0xff] %v238
    $region25: #{tpu_custom_call.1} parent=1 // pred_fallthru
      _
    // Predicated region
    $region26: #{tpu_custom_call.1} parent=1 // pred_check
      _
    $region27: #{tpu_custom_call.1} parent=1 // pred_check_branch
      %242 = sbr.rel (0) target = $region29
    $region28: #{tpu_custom_call.1} parent=1 // pred_region
      %244 = vsyncadd [#allocation5], 0
      %s245 = sshll.u32 [#allocation8], 4
      %s246 = int_to_ptr.vmem [resolvable:$true] %s245
      %s247 = sshll.u32 %s2, 4
      %s248 = int_to_ptr.hbm [resolvable:$true] %s247
      %253 = dma.vmem_to_hbm [thread:$0]  %s246, 256, %s248, [#allocation5], 128, 128, 8
    $region29: #{tpu_custom_call.1} parent=1 // pred_fallthru
      _
    // Predicated region
    $region30: #{tpu_custom_call.1} parent=1 // pred_check
      _
    $region31: #{tpu_custom_call.1} parent=1 // pred_check_branch
      %255 = sbr.rel (0) target = $region33
    $region32: #{tpu_custom_call.1} parent=1 // pred_region
      %257 = dma.done [#allocation5], 256
    $region33: #{tpu_custom_call.1} parent=1 // pred_fallthru
      _
    %258 = vsyncpa [#allocation4], 1
    %259 = vsyncpa [#allocation7], 1
    %260 = vsyncpa [#allocation5], 1

</llo_original>
